<compile_context>
chip_gen: v7x
topology: tpu7x:2x2x1
jax: 0.10.0
libtpu: 0.0.40
codegen_flags: <defaults>
</compile_context>

<pallas_src>
import jax
import jax.numpy as jnp
import numpy as np
from jax.experimental import pallas as pl
from jax.experimental.pallas import tpu as pltpu


_K_BLOCK_MAX = 2048   # K slab (cols of x / rows of wc) per grid step at large D_in.


def _round_up(v, m):
    return ((v + m - 1) // m) * m


def _k_tiling(d_in):
    """K-block size, number of K steps, and the zero-padded K extent."""
    if d_in <= _K_BLOCK_MAX:
        k_block = _round_up(d_in, 256)   # lane-aligned x block / sublane-aligned wc block
    else:
        k_block = _K_BLOCK_MAX
    num_k = -(-d_in // k_block)
    return k_block, num_k, num_k * k_block


def _m_tiling(m):
    """Row-tile size/count: multiples of 16 (bf16 packing), never a padding-only tile."""
    if m <= 16:
        tile_m = 16                              # one tile; single-TC chips do 1 step
    elif m <= 256:
        tile_m = _round_up(-(-m // 2), 16)       # 2 tiles, BOTH with real rows (v7x megacore)
    else:
        tile_m = 128
    num_m = -(-m // tile_m)
    return tile_m, num_m, num_m * tile_m


def cnn_only_kernel(x_ref, wc_ref, consts_ref, o_ref, acc_ref):
    # x_ref      : (TILE_M, K_BLOCK) bf16 -- flattened last-frame face-0 images (rows = batch)
    # wc_ref     : (K_BLOCK, F_cnn)  bf16 -- frozen backbone stand-in weight, one K slab
    # consts_ref : (8, F_cnn)        f32  -- row 0: backbone bias, row 1: fused head w1@w2
    # o_ref      : (TILE_M, 1)       f32  -- per-row head logit (fused bias added in wrapper)
    # acc_ref    : (TILE_M, F_cnn)   f32  -- matmul accumulator across the K grid axis
    k = pl.program_id(1)

    @pl.when(k == 0)
    def _():
        acc_ref[...] = jnp.zeros_like(acc_ref)

    # Backbone stand-in: bf16 MXU matmul, f32 accumulation across K slabs.
    acc_ref[...] += jnp.dot(x_ref[...], wc_ref[...], preferred_element_type=jnp.float32)

    @pl.when(k == pl.num_programs(1) - 1)
    def _():
        # Bias + ReLU epilogue, then the fused fc1.fc2 head as a VPU multiply + lane
        # reduction (avoids an N=1 MXU matmul).  At tile_m <= 128 feats is <= 64 vregs;
        # chunk over F_cnn only if a bundle dump shows spills.
        feats = jnp.maximum(acc_ref[...] + consts_ref[0:1, :], 0.0)
        o_ref[...] = jnp.sum(feats * consts_ref[1:2, :], axis=-1, keepdims=True)


def cnn_only_forward(imgs, params):
    """imgs: (B, frame, face, C, H, W) float32.  Returns (B, 1) like the torch module."""
    B, frame, face, C, H, W = imgs.shape
    D_in = C * H * W
    wc_bf16, consts, b_fused = params
    F_cnn = wc_bf16.shape[1]

    # Torch only consumes fc2(h[:, -1, :]): nothing couples frames and dropout is
    # identity in eval, so the backbone only needs the LAST frame's face-0 image.
    # M = B instead of B*frame (exact frame-x saving; bit-identical output).
    x = imgs[:, -1, 0].reshape(B, D_in).astype(jnp.bfloat16)
    M = B

    tile_m, num_m, m_pad = _m_tiling(M)
    k_block, num_k, d_pad = _k_tiling(D_in)
    assert wc_bf16.shape[0] == d_pad, "weight must be padded by prepare_kernel_params"

    if m_pad > M or d_pad > D_in:
        x = jnp.pad(x, ((0, m_pad - M), (0, d_pad - D_in)))   # zero rows/cols are exact

    # Constant-index operands are single-buffered; when K is tiled the weight slabs keep
    # default double-buffering so the MXU stays fed from prefetched slabs.
    if num_k == 1:
        wc_spec = pl.BlockSpec((k_block, F_cnn), lambda i, k: (k, 0),
                               pipeline_mode=pl.Buffered(1))
    else:
        wc_spec = pl.BlockSpec((k_block, F_cnn), lambda i, k: (k, 0))

    cost = pl.CostEstimate(
        flops=2 * m_pad * d_pad * F_cnn + 3 * m_pad * F_cnn,
        transcendentals=0,
        bytes_accessed=(m_pad * d_pad * 2                # x (bf16)
                        + num_m * d_pad * F_cnn * 2      # wc slabs (bf16), per row tile
                        + 8 * F_cnn * 4                  # packed constants
                        + m_pad * 4),                    # logits out
    )

    logits = pl.pallas_call(
        cnn_only_kernel,
        out_shape=jax.ShapeDtypeStruct((m_pad, 1), jnp.float32),
        grid=(num_m, num_k),
        in_specs=[
            pl.BlockSpec((tile_m, k_block), lambda i, k: (i, k)),   # x row/K tile
            wc_spec,                                                # backbone weight slab
            pl.BlockSpec((8, F_cnn), lambda i, k: (0, 0),
                         pipeline_mode=pl.Buffered(1)),             # packed small constants
        ],
        out_specs=pl.BlockSpec((tile_m, 1), lambda i, k: (i, 0)),
        scratch_shapes=[pltpu.VMEM((tile_m, F_cnn), jnp.float32)],
        compiler_params=pltpu.CompilerParams(
            dimension_semantics=("parallel", "arbitrary")),
        # TODO(synk): at the real D_in (3*224*224) on v5e/v6e, raise vmem_limit_bytes via
        # CompilerParams and grow k_block to 4096-8192 to amortize per-step overhead; on
        # v7x keep k_block <= 2048 for the 64 MiB VMEM.
        cost_estimate=cost,
    )(x, wc_bf16, consts)

    # Head bias + sigmoid once per sample (EUP work is B, not B*frame).  Padded rows
    # (>= M) hold garbage and are never read.
    return jax.nn.sigmoid(logits[:M, 0] + b_fused).reshape(B, 1)


def init_params(key, d_in, f_cnn=512, h1=64, out_size=1):
    """Raw (unfused) parameters.  fc1/fc2 follow CNN_Only.init_weights."""
    k1, k2, k3, k4 = jax.random.split(key, 4)
    # Frozen backbone stand-in (TODO(synk): real frozen torchvision ResNet-18 trunk).
    wc = jax.random.uniform(k1, (d_in, f_cnn), jnp.float32, -0.05, 0.05)
    bc = jax.random.uniform(k4, (f_cnn,), jnp.float32, -0.05, 0.05)
    # fc1 / fc2: uniform(-0.1, 0.1) weights, zero biases (stored as (in, out)).
    w1 = jax.random.uniform(k2, (f_cnn, h1), jnp.float32, -0.1, 0.1)
    b1 = jnp.zeros((h1,), jnp.float32)
    w2 = jax.random.uniform(k3, (h1, out_size), jnp.float32, -0.1, 0.1)
    b2 = jnp.zeros((out_size,), jnp.float32)
    return wc, bc, w1, b1, w2, b2


def prepare_kernel_params(raw):
    """Offline fusion + packing: fc1@fc2 -> one vector; small constants -> one VMEM slab;
    backbone weight cast to bf16 and zero-padded along K to the kernel's K tiling."""
    wc, bc, w1, b1, w2, b2 = raw
    d_in, f_cnn = wc.shape
    hi = jax.lax.Precision.HIGHEST
    w_fused = jnp.dot(w1, w2, precision=hi)[:, 0]          # (F_cnn,)
    b_fused = jnp.dot(b1, w2, precision=hi)[0] + b2[0]     # scalar
    consts = jnp.zeros((8, f_cnn), jnp.float32)
    consts = consts.at[0].set(bc)                          # backbone bias
    consts = consts.at[1].set(w_fused)                     # fused head weight
    _, _, d_pad = _k_tiling(d_in)
    wc_bf16 = jnp.pad(wc, ((0, d_pad - d_in), (0, 0))).astype(jnp.bfloat16)
    return wc_bf16, consts, b_fused


def reference_forward(imgs, raw):
    """Pure-JAX mirror of CNN_Only.forward (eval mode: dropout = identity)."""
    B, frame, face, C, H, W = imgs.shape
    wc, bc, w1, b1, w2, b2 = raw
    with jax.default_matmul_precision("highest"):
        x = imgs[:, :, 0].reshape(B * frame, C * H * W)
        # Match the kernel's bf16 rounding of x / wc; accumulate in f32.
        x = x.astype(jnp.bfloat16).astype(jnp.float32)
        wcf = wc.astype(jnp.bfloat16).astype(jnp.float32)
        feats = jnp.maximum(x @ wcf + bc, 0.0)             # backbone stand-in
        feats = feats.reshape(B, frame, -1)
        h = feats @ w1 + b1                                # fc1 on all frames
        s = h[:, -1, :] @ w2 + b2                          # fc2 on the LAST frame only
        return jax.nn.sigmoid(s)                           # (B, 1)


if __name__ == "__main__":
    key = jax.random.PRNGKey(0)
    kx, kp = jax.random.split(key)

    # Small shapes consistent with the module: B=2, frames=4, face=2, 3x16x16 images.
    B, frame, face, C, H, W = 2, 4, 2, 3, 16, 16
    imgs = jax.random.normal(kx, (B, frame, face, C, H, W), jnp.float32)

    raw = init_params(kp, d_in=C * H * W, f_cnn=512, h1=64, out_size=1)
    params = prepare_kernel_params(raw)

    y = cnn_only_forward(imgs, params)
    y = jax.block_until_ready(y)

    y_ref = reference_forward(imgs, raw)
    assert y.shape == (B, 1), y.shape
    np.testing.assert_allclose(np.asarray(y), np.asarray(y_ref), rtol=1e-3, atol=1e-3)
    print("KERNEL_OK")
</pallas_src>

<mosaic_0001>
module attributes {stable_mosaic.version = 11 : i64} {
  func.func @cnn_only_kernel(%arg0: i32, %arg1: i32, %arg2: memref<16x768xbf16, #tpu.memory_space<vmem>>, %arg3: memref<768x512xbf16, #tpu.memory_space<vmem>>, %arg4: memref<8x512xf32, #tpu.memory_space<vmem>>, %arg5: memref<16x1xf32, #tpu.memory_space<vmem>>, %arg6: memref<16x512xf32, #tpu.memory_space<vmem>>) attributes {dimension_semantics = [#tpu.dimension_semantics<parallel>, #tpu.dimension_semantics<arbitrary>], iteration_bounds = array<i64: 1, 1>, scalar_prefetch = 0 : i64, scratch_operands = 1 : i64, tpu.core_type = #tpu.core_type<tc>, window_params = [{transform_indices = @transform_0, window_bounds = array<i64: 16, 768>}, {pipeline_mode = #tpu.pipeline_mode<synchronous>, transform_indices = @transform_1, window_bounds = array<i64: 768, 512>}, {pipeline_mode = #tpu.pipeline_mode<synchronous>, transform_indices = @transform_2, window_bounds = array<i64: 8, 512>}, {transform_indices = @transform_3, window_bounds = array<i64: 16, 1>}]} {
    %c0_i32 = arith.constant 0 : i32
    %0 = arith.cmpi eq, %arg1, %c0_i32 : i32
    %1 = arith.extui %0 : i1 to i32
    %c0_i32_0 = arith.constant 0 : i32
    %2 = arith.cmpi ne, %1, %c0_i32_0 : i32
    scf.if %2 {
      %cst_10 = arith.constant 0.000000e+00 : f32
      %12 = vector.broadcast %cst_10 : f32 to vector<16x512xf32>
      %c0_11 = arith.constant 0 : index
      %c0_12 = arith.constant 0 : index
      %13 = vector.load %arg6[%c0_11, %c0_12] : memref<16x512xf32, #tpu.memory_space<vmem>>, vector<16x512xf32>
      tpu.vector_store %arg6[%c0_11, %c0_12], %12 {strides = array<i32>} : memref<16x512xf32, #tpu.memory_space<vmem>>, vector<16x512xf32>,
    } else {
    }
    %c0 = arith.constant 0 : index
    %c0_1 = arith.constant 0 : index
    %3 = vector.load %arg6[%c0, %c0_1] : memref<16x512xf32, #tpu.memory_space<vmem>>, vector<16x512xf32>
    %c0_2 = arith.constant 0 : index
    %c0_3 = arith.constant 0 : index
    %4 = vector.load %arg2[%c0_2, %c0_3] : memref<16x768xbf16, #tpu.memory_space<vmem>>, vector<16x768xbf16>
    %c0_4 = arith.constant 0 : index
    %c0_5 = arith.constant 0 : index
    %5 = vector.load %arg3[%c0_4, %c0_5] : memref<768x512xbf16, #tpu.memory_space<vmem>>, vector<768x512xbf16>
    %cst = arith.constant dense<0.000000e+00> : vector<16x512xf32>
    %6 = tpu.matmul %4, %5, %cst {dimension_numbers = #tpu.dot_dimension_numbers<[1], [0], [0], [1], [0, 0, 1, 1], [], []>} : vector<16x768xbf16>, vector<768x512xbf16>, vector<16x512xf32> -> vector<16x512xf32>
    %7 = arith.addf %3, %6 : vector<16x512xf32>
    %c0_6 = arith.constant 0 : index
    %c0_7 = arith.constant 0 : index
    %8 = vector.load %arg6[%c0_6, %c0_7] : memref<16x512xf32, #tpu.memory_space<vmem>>, vector<16x512xf32>
    tpu.vector_store %arg6[%c0_6, %c0_7], %7 {strides = array<i32>} : memref<16x512xf32, #tpu.memory_space<vmem>>, vector<16x512xf32>,
    %c0_i32_8 = arith.constant 0 : i32
    %9 = arith.cmpi eq, %arg1, %c0_i32_8 : i32
    %10 = arith.extui %9 : i1 to i32
    %c0_i32_9 = arith.constant 0 : i32
    %11 = arith.cmpi ne, %10, %c0_i32_9 : i32
    scf.if %11 {
      %c0_10 = arith.constant 0 : index
      %c0_11 = arith.constant 0 : index
      %12 = vector.load %arg6[%c0_10, %c0_11] : memref<16x512xf32, #tpu.memory_space<vmem>>, vector<16x512xf32>
      %c0_12 = arith.constant 0 : index
      %c0_13 = arith.constant 0 : index
      %13 = vector.load %arg4[%c0_12, %c0_13] : memref<8x512xf32, #tpu.memory_space<vmem>>, vector<1x512xf32>
      %14 = vector.broadcast %13 : vector<1x512xf32> to vector<16x512xf32>
      %15 = arith.addf %12, %14 : vector<16x512xf32>
      %cst_14 = arith.constant 0.000000e+00 : f32
      %16 = vector.broadcast %cst_14 : f32 to vector<16x512xf32>
      %17 = arith.maximumf %15, %16 : vector<16x512xf32>
      %c1 = arith.constant 1 : index
      %c0_15 = arith.constant 0 : index
      %18 = vector.load %arg4[%c1, %c0_15] : memref<8x512xf32, #tpu.memory_space<vmem>>, vector<1x512xf32>
      %19 = vector.broadcast %18 : vector<1x512xf32> to vector<16x512xf32>
      %20 = arith.mulf %17, %19 : vector<16x512xf32>
      %cst_16 = arith.constant dense<0.000000e+00> : vector<16xf32>
      %21 = vector.multi_reduction <add>, %20, %cst_16 [1] : vector<16x512xf32> to vector<16xf32>
      %22 = vector.shape_cast %21 : vector<16xf32> to vector<16x1xf32>
      %c0_17 = arith.constant 0 : index
      %c0_18 = arith.constant 0 : index
      %23 = vector.load %arg5[%c0_17, %c0_18] : memref<16x1xf32, #tpu.memory_space<vmem>>, vector<16x1xf32>
      tpu.vector_store %arg5[%c0_17, %c0_18], %22 {strides = array<i32>} : memref<16x1xf32, #tpu.memory_space<vmem>>, vector<16x1xf32>,
    } else {
    }
    return
  }
  func.func @transform_0(%arg0: i32, %arg1: i32) -> (i32, i32) {
    %c0_i32 = arith.constant 0 : i32
    return %arg0, %arg1 : i32, i32
  }
  func.func @transform_1(%arg0: i32, %arg1: i32) -> (i32, i32) {
    %c0_i32 = arith.constant 0 : i32
    %c0_i32_0 = arith.constant 0 : i32
    return %arg1, %c0_i32 : i32, i32
  }
  func.func @transform_2(%arg0: i32, %arg1: i32) -> (i32, i32) {
    %c0_i32 = arith.constant 0 : i32
    %c0_i32_0 = arith.constant 0 : i32
    %c0_i32_1 = arith.constant 0 : i32
    return %c0_i32, %c0_i32_0 : i32, i32
  }
  func.func @transform_3(%arg0: i32, %arg1: i32) -> (i32, i32) {
    %c0_i32 = arith.constant 0 : i32
    %c0_i32_0 = arith.constant 0 : i32
    return %arg0, %c0_i32 : i32, i32
  }
}

</mosaic_0001>

<llo_original>
// kernel: tpu_custom_call.1
$region0: #{tpu_custom_call.1}
  #allocation0 [shape = 'u32[]', space=smem, size = 0x4, offset = 0x4, fixed_abs, tag = 'smem constant byte address 0x4 - core index']
  #allocation1 [shape = 'u32[144,128]{1,0:T(1,128)}', space=vmem, size = 0x12000, scoped, tag = 'internal scratch']
  #allocation2 [shape = 'f32[16,512]{1,0:T(8,128)}', space=vmem, size = 0x8000, scoped, tag = 'scratch operand']
  %s0 = inlined_call_operand.hbm [shape: bf16[16,768], index: 0, kind: input, shape index: {}]
  %s1 = inlined_call_operand.hbm [shape: bf16[768,512], index: 1, kind: input, shape index: {}]
  %s2 = inlined_call_operand.hbm [shape: f32[8,512], index: 2, kind: input, shape index: {}]
  %s3 = inlined_call_operand.vmem [shape: f32[16,1], index: 3, kind: output, shape index: {}]
  %s4 = sld [smem:[#allocation0]]
  $region42: #{tpu_custom_call.1} parent=0
    _
  %s6 = ssub.s32 1, %s4
  %s7 = scalar_select 0, %s6, %s4
  $region1: #{tpu_custom_call.1} parent=0
    #allocation3 [shape = 'u8[24576]{0}', space=vmem, size = 0x6000, scoped, tag = 'input window, operand 0, single buffered']
    #allocation4 [shape = 's32[1]{0}', space=sflag, size = 0x4, scoped, tag = 'scoped memory for tpu_custom_call.1']
    #allocation5 [shape = 'u8[786432]{0}', space=vmem, size = 0xc0000, scoped, tag = 'input window, operand 1, single buffered']
    #allocation6 [shape = 's32[1]{0}', space=sflag, size = 0x4, scoped, tag = 'scoped memory for tpu_custom_call.1']
    #allocation7 [shape = 'u8[16384]{0}', space=vmem, size = 0x4000, scoped, tag = 'input window, operand 2, single buffered']
    %8 = vsyncpa [#allocation4], 0
    %9 = vsyncpa [#allocation6], 0
    // Predicated region
    $region2: #{tpu_custom_call.1} parent=1 // pred_check
      _
    $region3: #{tpu_custom_call.1} parent=1 // pred_check_branch
      %11 = sbr.rel (0) target = $region5
    $region4: #{tpu_custom_call.1} parent=1 // pred_region
      %s13 = ssub.s32 768, 768
      %14 = vsyncadd [#allocation4], %s13
      %s15 = sshll.u32 [#allocation3], 4
      %s16 = int_to_ptr.vmem [resolvable:$true] %s15
      %21 = dma.hbm_to_vmem [thread:$0]  %s0, 768, %s16, [#allocation4], 384, 384, 24
    $region5: #{tpu_custom_call.1} parent=1 // pred_fallthru
      _
    // Predicated region
    $region6: #{tpu_custom_call.1} parent=1 // pred_check
      _
    $region7: #{tpu_custom_call.1} parent=1 // pred_check_branch
      %23 = sbr.rel (0) target = $region9
    $region8: #{tpu_custom_call.1} parent=1 // pred_region
      %s25 = ssub.s32 24576, 24576
      %26 = vsyncadd [#allocation6], %s25
      %s27 = sshll.u32 [#allocation5], 4
      %s28 = int_to_ptr.vmem [resolvable:$true] %s27
      %33 = dma.hbm_to_vmem [thread:$0]  %s1, 24576, %s28, [#allocation6], 256, 256, 16
    $region9: #{tpu_custom_call.1} parent=1 // pred_fallthru
      _
    // Predicated region
    $region10: #{tpu_custom_call.1} parent=1 // pred_check
      _
    $region11: #{tpu_custom_call.1} parent=1 // pred_check_branch
      %35 = sbr.rel (0) target = $region13
    $region12: #{tpu_custom_call.1} parent=1 // pred_region
      %s37 = ssub.s32 512, 512
      %38 = vsyncadd [#allocation6], %s37
      %s40 = sshll.u32 [#allocation7], 4
      %s41 = int_to_ptr.vmem [resolvable:$true] %s40
      %43 = dma.hbm_to_vmem [thread:$0]  %s2, 512, %s41, [#allocation6]
    $region13: #{tpu_custom_call.1} parent=1 // pred_fallthru
      _
    // Predicated region
    $region14: #{tpu_custom_call.1} parent=1 // pred_check
      _
    $region15: #{tpu_custom_call.1} parent=1 // pred_check_branch
      %45 = sbr.rel (0) target = $region17
    $region16: #{tpu_custom_call.1} parent=1 // pred_region
      %46 = dma.done [#allocation4], 768
    $region17: #{tpu_custom_call.1} parent=1 // pred_fallthru
      _
    // Predicated region
    $region18: #{tpu_custom_call.1} parent=1 // pred_check
      _
    $region19: #{tpu_custom_call.1} parent=1 // pred_check_branch
      %48 = sbr.rel (0) target = $region21
    $region20: #{tpu_custom_call.1} parent=1 // pred_region
      %49 = dma.done [#allocation6], 24576
    $region21: #{tpu_custom_call.1} parent=1 // pred_fallthru
      _
    // Predicated region
    $region22: #{tpu_custom_call.1} parent=1 // pred_check
      _
    $region23: #{tpu_custom_call.1} parent=1 // pred_check_branch
      %51 = sbr.rel (0) target = $region25
    $region24: #{tpu_custom_call.1} parent=1 // pred_region
      %52 = dma.done [#allocation6], 512
    $region25: #{tpu_custom_call.1} parent=1 // pred_fallthru
      _
    %p53 = scmp.eq.s32.totalorder 0, 0
    // Predicated region
    $region26: #{tpu_custom_call.1} parent=1 // pred_check
      %p54 = pneg %p53
    $region27: #{tpu_custom_call.1} parent=1 // pred_check_branch
      %56 = sbr.rel (%p54) target = $region29
    $region28: #{tpu_custom_call.1} parent=1 // pred_region
      %57 = vst [vmem:[#allocation2] sm:$0xff] 0.0
      %58 = vst [vmem:[#allocation2 + $0x8] sm:$0xff] 0.0
      %59 = vst [vmem:[#allocation2 + $0x10] sm:$0xff] 0.0
      %60 = vst [vmem:[#allocation2 + $0x18] sm:$0xff] 0.0
      %61 = vst [vmem:[#allocation2 + $0x20] sm:$0xff] 0.0
      %62 = vst [vmem:[#allocation2 + $0x28] sm:$0xff] 0.0
      %63 = vst [vmem:[#allocation2 + $0x30] sm:$0xff] 0.0
      %64 = vst [vmem:[#allocation2 + $0x38] sm:$0xff] 0.0
    $region29: #{tpu_custom_call.1} parent=1 // pred_fallthru
      _
    %v65 = vld [vmem:[#allocation2] sm:$0xff]
    %v66 = vld [vmem:[#allocation2 + $0x8] sm:$0xff]
    %v67 = vld [vmem:[#allocation2 + $0x10] sm:$0xff]
    %v68 = vld [vmem:[#allocation2 + $0x18] sm:$0xff]
    %v69 = vld [vmem:[#allocation2 + $0x20] sm:$0xff]
    %v70 = vld [vmem:[#allocation2 + $0x28] sm:$0xff]
    %v71 = vld [vmem:[#allocation2 + $0x30] sm:$0xff]
    %v72 = vld [vmem:[#allocation2 + $0x38] sm:$0xff]
    %v73 = vld [vmem:[#allocation3] sm:$0xff]
    %v74 = vld [vmem:[#allocation3 + $0x8] sm:$0xff]
    %v75 = vld [vmem:[#allocation3 + $0x10] sm:$0xff]
    %v76 = vld [vmem:[#allocation3 + $0x18] sm:$0xff]
    %v77 = vld [vmem:[#allocation3 + $0x20] sm:$0xff]
    %v78 = vld [vmem:[#allocation3 + $0x28] sm:$0xff]
    %v79 = vld [vmem:[#allocation5] sm:$0xff]
    %v80 = vld [vmem:[#allocation5 + $0x8] sm:$0xff]
    %v81 = vld [vmem:[#allocation5 + $0x10] sm:$0xff]
    %v82 = vld [vmem:[#allocation5 + $0x18] sm:$0xff]
    %v83 = vld [vmem:[#allocation5 + $0x20] sm:$0xff]
    %v84 = vld [vmem:[#allocation5 + $0x28] sm:$0xff]
    %v85 = vld [vmem:[#allocation5 + $0x30] sm:$0xff]
    %v86 = vld [vmem:[#allocation5 + $0x38] sm:$0xff]
    %v87 = vld [vmem:[#allocation5 + $0x40] sm:$0xff]
    %v88 = vld [vmem:[#allocation5 + $0x48] sm:$0xff]
    %v89 = vld [vmem:[#allocation5 + $0x50] sm:$0xff]
    %v90 = vld [vmem:[#allocation5 + $0x58] sm:$0xff]
    %v91 = vld [vmem:[#allocation5 + $0x60] sm:$0xff]
    %v92 = vld [vmem:[#allocation5 + $0x68] sm:$0xff]
    %v93 = vld [vmem:[#allocation5 + $0x70] sm:$0xff]
    %v94 = vld [vmem:[#allocation5 + $0x78] sm:$0xff]
    %v95 = vld [vmem:[#allocation5 + $0x80] sm:$0xff]
    %v96 = vld [vmem:[#allocation5 + $0x88] sm:$0xff]
    %v97 = vld [vmem:[#allocation5 + $0x90] sm:$0xff]
    %v98 = vld [vmem:[#allocation5 + $0x98] sm:$0xff]
    %v99 = vld [vmem:[#allocation5 + $0xa0] sm:$0xff]
    %v100 = vld [vmem:[#allocation5 + $0xa8] sm:$0xff]
    %v101 = vld [vmem:[#allocation5 + $0xb0] sm:$0xff]
    %v102 = vld [vmem:[#allocation5 + $0xb8] sm:$0xff]
    %v103 = vld [vmem:[#allocation5 + $0xc0] sm:$0xff]
    %v104 = vld [vmem:[#allocation5 + $0xc8] sm:$0xff]
    %v105 = vld [vmem:[#allocation5 + $0xd0] sm:$0xff]
    %v106 = vld [vmem:[#allocation5 + $0xd8] sm:$0xff]
    %v107 = vld [vmem:[#allocation5 + $0xe0] sm:$0xff]
    %v108 = vld [vmem:[#allocation5 + $0xe8] sm:$0xff]
    %v109 = vld [vmem:[#allocation5 + $0xf0] sm:$0xff]
    %v110 = vld [vmem:[#allocation5 + $0xf8] sm:$0xff]
    %v111 = vld [vmem:[#allocation5 + $0x100] sm:$0xff]
    %v112 = vld [vmem:[#allocation5 + $0x108] sm:$0xff]
    %v113 = vld [vmem:[#allocation5 + $0x110] sm:$0xff]
    %v114 = vld [vmem:[#allocation5 + $0x118] sm:$0xff]
    %v115 = vld [vmem:[#allocation5 + $0x120] sm:$0xff]
    %v116 = vld [vmem:[#allocation5 + $0x128] sm:$0xff]
    %v117 = vld [vmem:[#allocation5 + $0x130] sm:$0xff]
    %v118 = vld [vmem:[#allocation5 + $0x138] sm:$0xff]
    %v119 = vld [vmem:[#allocation5 + $0x140] sm:$0xff]
    %v120 = vld [vmem:[#allocation5 + $0x148] sm:$0xff]
    %v121 = vld [vmem:[#allocation5 + $0x150] sm:$0xff]
    %v122 = vld [vmem:[#allocation5 + $0x158] sm:$0xff]
    %v123 = vld [vmem:[#allocation5 + $0x160] sm:$0xff]
    %v124 = vld [vmem:[#allocation5 + $0x168] sm:$0xff]
    %v125 = vld [vmem:[#allocation5 + $0x170] sm:$0xff]
    %v126 = vld [vmem:[#allocation5 + $0x178] sm:$0xff]
    %v127 = vld [vmem:[#allocation5 + $0x180] sm:$0xff]
    %v128 = vld [vmem:[#allocation5 + $0x188] sm:$0xff]
    %v129 = vld [vmem:[#allocation5 + $0x190] sm:$0xff]
    %v130 = vld [vmem:[#allocation5 + $0x198] sm:$0xff]
    %v131 = vld [vmem:[#allocation5 + $0x1a0] sm:$0xff]
    %v132 = vld [vmem:[#allocation5 + $0x1a8] sm:$0xff]
    %v133 = vld [vmem:[#allocation5 + $0x1b0] sm:$0xff]
    %v134 = vld [vmem:[#allocation5 + $0x1b8] sm:$0xff]
    %v135 = vld [vmem:[#allocation5 + $0x1c0] sm:$0xff]
    %v136 = vld [vmem:[#allocation5 + $0x1c8] sm:$0xff]
    %v137 = vld [vmem:[#allocation5 + $0x1d0] sm:$0xff]
    %v138 = vld [vmem:[#allocation5 + $0x1d8] sm:$0xff]
    %v139 = vld [vmem:[#allocation5 + $0x1e0] sm:$0xff]
    %v140 = vld [vmem:[#allocation5 + $0x1e8] sm:$0xff]
    %v141 = vld [vmem:[#allocation5 + $0x1f0] sm:$0xff]
    %v142 = vld [vmem:[#allocation5 + $0x1f8] sm:$0xff]
    %v143 = vld [vmem:[#allocation5 + $0x200] sm:$0xff]
    %v144 = vld [vmem:[#allocation5 + $0x208] sm:$0xff]
    %v145 = vld [vmem:[#allocation5 + $0x210] sm:$0xff]
    %v146 = vld [vmem:[#allocation5 + $0x218] sm:$0xff]
    %v147 = vld [vmem:[#allocation5 + $0x220] sm:$0xff]
    %v148 = vld [vmem:[#allocation5 + $0x228] sm:$0xff]
    %v149 = vld [vmem:[#allocation5 + $0x230] sm:$0xff]
    %v150 = vld [vmem:[#allocation5 + $0x238] sm:$0xff]
    %v151 = vld [vmem:[#allocation5 + $0x240] sm:$0xff]
    %v152 = vld [vmem:[#allocation5 + $0x248] sm:$0xff]
    %v153 = vld [vmem:[#allocation5 + $0x250] sm:$0xff]
    %v154 = vld [vmem:[#allocation5 + $0x258] sm:$0xff]
    %v155 = vld [vmem:[#allocation5 + $0x260] sm:$0xff]
    %v156 = vld [vmem:[#allocation5 + $0x268] sm:$0xff]
    %v157 = vld [vmem:[#allocation5 + $0x270] sm:$0xff]
    %v158 = vld [vmem:[#allocation5 + $0x278] sm:$0xff]
    %v159 = vld [vmem:[#allocation5 + $0x280] sm:$0xff]
    %v160 = vld [vmem:[#allocation5 + $0x288] sm:$0xff]
    %v161 = vld [vmem:[#allocation5 + $0x290] sm:$0xff]
    %v162 = vld [vmem:[#allocation5 + $0x298] sm:$0xff]
    %v163 = vld [vmem:[#allocation5 + $0x2a0] sm:$0xff]
    %v164 = vld [vmem:[#allocation5 + $0x2a8] sm:$0xff]
    %v165 = vld [vmem:[#allocation5 + $0x2b0] sm:$0xff]
    %v166 = vld [vmem:[#allocation5 + $0x2b8] sm:$0xff]
    %v167 = vld [vmem:[#allocation5 + $0x2c0] sm:$0xff]
    %v168 = vld [vmem:[#allocation5 + $0x2c8] sm:$0xff]
    %v169 = vld [vmem:[#allocation5 + $0x2d0] sm:$0xff]
    %v170 = vld [vmem:[#allocation5 + $0x2d8] sm:$0xff]
    %v171 = vld [vmem:[#allocation5 + $0x2e0] sm:$0xff]
    %v172 = vld [vmem:[#allocation5 + $0x2e8] sm:$0xff]
    %v173 = vld [vmem:[#allocation5 + $0x2f0] sm:$0xff]
    %v174 = vld [vmem:[#allocation5 + $0x2f8] sm:$0xff]
    %v175 = vld [vmem:[#allocation5 + $0x300] sm:$0xff]
    %v176 = vld [vmem:[#allocation5 + $0x308] sm:$0xff]
    %v177 = vld [vmem:[#allocation5 + $0x310] sm:$0xff]
    %v178 = vld [vmem:[#allocation5 + $0x318] sm:$0xff]
    %v179 = vld [vmem:[#allocation5 + $0x320] sm:$0xff]
    %v180 = vld [vmem:[#allocation5 + $0x328] sm:$0xff]
    %v181 = vld [vmem:[#allocation5 + $0x330] sm:$0xff]
    %v182 = vld [vmem:[#allocation5 + $0x338] sm:$0xff]
    %v183 = vld [vmem:[#allocation5 + $0x340] sm:$0xff]
    %v184 = vld [vmem:[#allocation5 + $0x348] sm:$0xff]
    %v185 = vld [vmem:[#allocation5 + $0x350] sm:$0xff]
    %v186 = vld [vmem:[#allocation5 + $0x358] sm:$0xff]
    %v187 = vld [vmem:[#allocation5 + $0x360] sm:$0xff]
    %v188 = vld [vmem:[#allocation5 + $0x368] sm:$0xff]
    %v189 = vld [vmem:[#allocation5 + $0x370] sm:$0xff]
    %v190 = vld [vmem:[#allocation5 + $0x378] sm:$0xff]
    %v191 = vld [vmem:[#allocation5 + $0x380] sm:$0xff]
    %v192 = vld [vmem:[#allocation5 + $0x388] sm:$0xff]
    %v193 = vld [vmem:[#allocation5 + $0x390] sm:$0xff]
    %v194 = vld [vmem:[#allocation5 + $0x398] sm:$0xff]
    %v195 = vld [vmem:[#allocation5 + $0x3a0] sm:$0xff]
    %v196 = vld [vmem:[#allocation5 + $0x3a8] sm:$0xff]
    %v197 = vld [vmem:[#allocation5 + $0x3b0] sm:$0xff]
    %v198 = vld [vmem:[#allocation5 + $0x3b8] sm:$0xff]
    %v199 = vld [vmem:[#allocation5 + $0x3c0] sm:$0xff]
    %v200 = vld [vmem:[#allocation5 + $0x3c8] sm:$0xff]
    %v201 = vld [vmem:[#allocation5 + $0x3d0] sm:$0xff]
    %v202 = vld [vmem:[#allocation5 + $0x3d8] sm:$0xff]
    %v203 = vld [vmem:[#allocation5 + $0x3e0] sm:$0xff]
    %v204 = vld [vmem:[#allocation5 + $0x3e8] sm:$0xff]
    %v205 = vld [vmem:[#allocation5 + $0x3f0] sm:$0xff]
    %v206 = vld [vmem:[#allocation5 + $0x3f8] sm:$0xff]
    %v207 = vld [vmem:[#allocation5 + $0x400] sm:$0xff]
    %v208 = vld [vmem:[#allocation5 + $0x408] sm:$0xff]
    %v209 = vld [vmem:[#allocation5 + $0x410] sm:$0xff]
    %v210 = vld [vmem:[#allocation5 + $0x418] sm:$0xff]
    %v211 = vld [vmem:[#allocation5 + $0x420] sm:$0xff]
    %v212 = vld [vmem:[#allocation5 + $0x428] sm:$0xff]
    %v213 = vld [vmem:[#allocation5 + $0x430] sm:$0xff]
    %v214 = vld [vmem:[#allocation5 + $0x438] sm:$0xff]
    %v215 = vld [vmem:[#allocation5 + $0x440] sm:$0xff]
    %v216 = vld [vmem:[#allocation5 + $0x448] sm:$0xff]
    %v217 = vld [vmem:[#allocation5 + $0x450] sm:$0xff]
    %v218 = vld [vmem:[#allocation5 + $0x458] sm:$0xff]
    %v219 = vld [vmem:[#allocation5 + $0x460] sm:$0xff]
    %v220 = vld [vmem:[#allocation5 + $0x468] sm:$0xff]
    %v221 = vld [vmem:[#allocation5 + $0x470] sm:$0xff]
    %v222 = vld [vmem:[#allocation5 + $0x478] sm:$0xff]
    %v223 = vld [vmem:[#allocation5 + $0x480] sm:$0xff]
    %v224 = vld [vmem:[#allocation5 + $0x488] sm:$0xff]
    %v225 = vld [vmem:[#allocation5 + $0x490] sm:$0xff]
    %v226 = vld [vmem:[#allocation5 + $0x498] sm:$0xff]
    %v227 = vld [vmem:[#allocation5 + $0x4a0] sm:$0xff]
    %v228 = vld [vmem:[#allocation5 + $0x4a8] sm:$0xff]
    %v229 = vld [vmem:[#allocation5 + $0x4b0] sm:$0xff]
    %v230 = vld [vmem:[#allocation5 + $0x4b8] sm:$0xff]
    %v231 = vld [vmem:[#allocation5 + $0x4c0] sm:$0xff]
    %v232 = vld [vmem:[#allocation5 + $0x4c8] sm:$0xff]
    %v233 = vld [vmem:[#allocation5 + $0x4d0] sm:$0xff]
    %v234 = vld [vmem:[#allocation5 + $0x4d8] sm:$0xff]
    %v235 = vld [vmem:[#allocation5 + $0x4e0] sm:$0xff]
    %v236 = vld [vmem:[#allocation5 + $0x4e8] sm:$0xff]
    %v237 = vld [vmem:[#allocation5 + $0x4f0] sm:$0xff]
    %v238 = vld [vmem:[#allocation5 + $0x4f8] sm:$0xff]
    %v239 = vld [vmem:[#allocation5 + $0x500] sm:$0xff]
    %v240 = vld [vmem:[#allocation5 + $0x508] sm:$0xff]
    %v241 = vld [vmem:[#allocation5 + $0x510] sm:$0xff]
    %v242 = vld [vmem:[#allocation5 + $0x518] sm:$0xff]
    %v243 = vld [vmem:[#allocation5 + $0x520] sm:$0xff]
    %v244 = vld [vmem:[#allocation5 + $0x528] sm:$0xff]
    %v245 = vld [vmem:[#allocation5 + $0x530] sm:$0xff]
    %v246 = vld [vmem:[#allocation5 + $0x538] sm:$0xff]
    %v247 = vld [vmem:[#allocation5 + $0x540] sm:$0xff]
    %v248 = vld [vmem:[#allocation5 + $0x548] sm:$0xff]
    %v249 = vld [vmem:[#allocation5 + $0x550] sm:$0xff]
    %v250 = vld [vmem:[#allocation5 + $0x558] sm:$0xff]
    %v251 = vld [vmem:[#allocation5 + $0x560] sm:$0xff]
    %v252 = vld [vmem:[#allocation5 + $0x568] sm:$0xff]
    %v253 = vld [vmem:[#allocation5 + $0x570] sm:$0xff]
    %v254 = vld [vmem:[#allocation5 + $0x578] sm:$0xff]
    %v255 = vld [vmem:[#allocation5 + $0x580] sm:$0xff]
    %v256 = vld [vmem:[#allocation5 + $0x588] sm:$0xff]
    %v257 = vld [vmem:[#allocation5 + $0x590] sm:$0xff]
    %v258 = vld [vmem:[#allocation5 + $0x598] sm:$0xff]
    %v259 = vld [vmem:[#allocation5 + $0x5a0] sm:$0xff]
    %v260 = vld [vmem:[#allocation5 + $0x5a8] sm:$0xff]
    %v261 = vld [vmem:[#allocation5 + $0x5b0] sm:$0xff]
    %v262 = vld [vmem:[#allocation5 + $0x5b8] sm:$0xff]
    %v263 = vld [vmem:[#allocation5 + $0x5c0] sm:$0xff]
    %v264 = vld [vmem:[#allocation5 + $0x5c8] sm:$0xff]
    %v265 = vld [vmem:[#allocation5 + $0x5d0] sm:$0xff]
    %v266 = vld [vmem:[#allocation5 + $0x5d8] sm:$0xff]
    %v267 = vld [vmem:[#allocation5 + $0x5e0] sm:$0xff]
    %v268 = vld [vmem:[#allocation5 + $0x5e8] sm:$0xff]
    %v269 = vld [vmem:[#allocation5 + $0x5f0] sm:$0xff]
    %v270 = vld [vmem:[#allocation5 + $0x5f8] sm:$0xff]
    %v277 = vunpack.c.l.b16 %v73
    %v278 = vunpack.c.h.b16 %v73
    %v279 = vunpack.c.l.b16 %v74
    %v280 = vunpack.c.h.b16 %v74
    %v281 = vunpack.c.l.b16 %v75
    %v282 = vunpack.c.h.b16 %v75
    %v283 = vunpack.c.l.b16 %v76
    %v284 = vunpack.c.h.b16 %v76
    %v285 = vunpack.c.l.b16 %v77
    %v286 = vunpack.c.h.b16 %v77
    %v287 = vunpack.c.l.b16 %v78
    %v288 = vunpack.c.h.b16 %v78
    %v289 = vpack.c.b16 %v283, %v277
    %v290 = vpack.c.b16 %v284, %v278
    %v291 = vpack.c.b16 %v285, %v279
    %v292 = vpack.c.b16 %v286, %v280
    %v293 = vpack.c.b16 %v287, %v281
    %v294 = vpack.c.b16 %v288, %v282
    %v493 = vunpack.c.l.b16 %v79
    %v494 = vunpack.c.h.b16 %v79
    %v495 = vunpack.c.l.b16 %v80
    %v496 = vunpack.c.h.b16 %v80
    %v497 = vunpack.c.l.b16 %v81
    %v498 = vunpack.c.h.b16 %v81
    %v499 = vunpack.c.l.b16 %v82
    %v500 = vunpack.c.h.b16 %v82
    %v501 = vunpack.c.l.b16 %v83
    %v502 = vunpack.c.h.b16 %v83
    %v503 = vunpack.c.l.b16 %v84
    %v504 = vunpack.c.h.b16 %v84
    %v505 = vunpack.c.l.b16 %v85
    %v506 = vunpack.c.h.b16 %v85
    %v507 = vunpack.c.l.b16 %v86
    %v508 = vunpack.c.h.b16 %v86
    %v509 = vunpack.c.l.b16 %v87
    %v510 = vunpack.c.h.b16 %v87
    %v511 = vunpack.c.l.b16 %v88
    %v512 = vunpack.c.h.b16 %v88
    %v513 = vunpack.c.l.b16 %v89
    %v514 = vunpack.c.h.b16 %v89
    %v515 = vunpack.c.l.b16 %v90
    %v516 = vunpack.c.h.b16 %v90
    %v517 = vunpack.c.l.b16 %v91
    %v518 = vunpack.c.h.b16 %v91
    %v519 = vunpack.c.l.b16 %v92
    %v520 = vunpack.c.h.b16 %v92
    %v521 = vunpack.c.l.b16 %v93
    %v522 = vunpack.c.h.b16 %v93
    %v523 = vunpack.c.l.b16 %v94
    %v524 = vunpack.c.h.b16 %v94
    %v525 = vunpack.c.l.b16 %v95
    %v526 = vunpack.c.h.b16 %v95
    %v527 = vunpack.c.l.b16 %v96
    %v528 = vunpack.c.h.b16 %v96
    %v529 = vunpack.c.l.b16 %v97
    %v530 = vunpack.c.h.b16 %v97
    %v531 = vunpack.c.l.b16 %v98
    %v532 = vunpack.c.h.b16 %v98
    %v533 = vunpack.c.l.b16 %v99
    %v534 = vunpack.c.h.b16 %v99
    %v535 = vunpack.c.l.b16 %v100
    %v536 = vunpack.c.h.b16 %v100
    %v537 = vunpack.c.l.b16 %v101
    %v538 = vunpack.c.h.b16 %v101
    %v539 = vunpack.c.l.b16 %v102
    %v540 = vunpack.c.h.b16 %v102
    %v541 = vunpack.c.l.b16 %v103
    %v542 = vunpack.c.h.b16 %v103
    %v543 = vunpack.c.l.b16 %v104
    %v544 = vunpack.c.h.b16 %v104
    %v545 = vunpack.c.l.b16 %v105
    %v546 = vunpack.c.h.b16 %v105
    %v547 = vunpack.c.l.b16 %v106
    %v548 = vunpack.c.h.b16 %v106
    %v549 = vunpack.c.l.b16 %v107
    %v550 = vunpack.c.h.b16 %v107
    %v551 = vunpack.c.l.b16 %v108
    %v552 = vunpack.c.h.b16 %v108
    %v553 = vunpack.c.l.b16 %v109
    %v554 = vunpack.c.h.b16 %v109
    %v555 = vunpack.c.l.b16 %v110
    %v556 = vunpack.c.h.b16 %v110
    %v557 = vunpack.c.l.b16 %v111
    %v558 = vunpack.c.h.b16 %v111
    %v559 = vunpack.c.l.b16 %v112
    %v560 = vunpack.c.h.b16 %v112
    %v561 = vunpack.c.l.b16 %v113
    %v562 = vunpack.c.h.b16 %v113
    %v563 = vunpack.c.l.b16 %v114
    %v564 = vunpack.c.h.b16 %v114
    %v565 = vunpack.c.l.b16 %v115
    %v566 = vunpack.c.h.b16 %v115
    %v567 = vunpack.c.l.b16 %v116
    %v568 = vunpack.c.h.b16 %v116
    %v569 = vunpack.c.l.b16 %v117
    %v570 = vunpack.c.h.b16 %v117
    %v571 = vunpack.c.l.b16 %v118
    %v572 = vunpack.c.h.b16 %v118
    %v573 = vunpack.c.l.b16 %v119
    %v574 = vunpack.c.h.b16 %v119
    %v575 = vunpack.c.l.b16 %v120
    %v576 = vunpack.c.h.b16 %v120
    %v577 = vunpack.c.l.b16 %v121
    %v578 = vunpack.c.h.b16 %v121
    %v579 = vunpack.c.l.b16 %v122
    %v580 = vunpack.c.h.b16 %v122
    %v581 = vunpack.c.l.b16 %v123
    %v582 = vunpack.c.h.b16 %v123
    %v583 = vunpack.c.l.b16 %v124
    %v584 = vunpack.c.h.b16 %v124
    %v585 = vunpack.c.l.b16 %v125
    %v586 = vunpack.c.h.b16 %v125
    %v587 = vunpack.c.l.b16 %v126
    %v588 = vunpack.c.h.b16 %v126
    %v589 = vunpack.c.l.b16 %v127
    %v590 = vunpack.c.h.b16 %v127
    %v591 = vunpack.c.l.b16 %v128
    %v592 = vunpack.c.h.b16 %v128
    %v593 = vunpack.c.l.b16 %v129
    %v594 = vunpack.c.h.b16 %v129
    %v595 = vunpack.c.l.b16 %v130
    %v596 = vunpack.c.h.b16 %v130
    %v597 = vunpack.c.l.b16 %v131
    %v598 = vunpack.c.h.b16 %v131
    %v599 = vunpack.c.l.b16 %v132
    %v600 = vunpack.c.h.b16 %v132
    %v601 = vunpack.c.l.b16 %v133
    %v602 = vunpack.c.h.b16 %v133
    %v603 = vunpack.c.l.b16 %v134
    %v604 = vunpack.c.h.b16 %v134
    %v605 = vunpack.c.l.b16 %v135
    %v606 = vunpack.c.h.b16 %v135
    %v607 = vunpack.c.l.b16 %v136
    %v608 = vunpack.c.h.b16 %v136
    %v609 = vunpack.c.l.b16 %v137
    %v610 = vunpack.c.h.b16 %v137
    %v611 = vunpack.c.l.b16 %v138
    %v612 = vunpack.c.h.b16 %v138
    %v613 = vunpack.c.l.b16 %v139
    %v614 = vunpack.c.h.b16 %v139
    %v615 = vunpack.c.l.b16 %v140
    %v616 = vunpack.c.h.b16 %v140
    %v617 = vunpack.c.l.b16 %v141
    %v618 = vunpack.c.h.b16 %v141
    %v619 = vunpack.c.l.b16 %v142
    %v620 = vunpack.c.h.b16 %v142
    %v621 = vunpack.c.l.b16 %v143
    %v622 = vunpack.c.h.b16 %v143
    %v623 = vunpack.c.l.b16 %v144
    %v624 = vunpack.c.h.b16 %v144
    %v625 = vunpack.c.l.b16 %v145
    %v626 = vunpack.c.h.b16 %v145
    %v627 = vunpack.c.l.b16 %v146
    %v628 = vunpack.c.h.b16 %v146
    %v629 = vunpack.c.l.b16 %v147
    %v630 = vunpack.c.h.b16 %v147
    %v631 = vunpack.c.l.b16 %v148
    %v632 = vunpack.c.h.b16 %v148
    %v633 = vunpack.c.l.b16 %v149
    %v634 = vunpack.c.h.b16 %v149
    %v635 = vunpack.c.l.b16 %v150
    %v636 = vunpack.c.h.b16 %v150
    %v637 = vunpack.c.l.b16 %v151
    %v638 = vunpack.c.h.b16 %v151
    %v639 = vunpack.c.l.b16 %v152
    %v640 = vunpack.c.h.b16 %v152
    %v641 = vunpack.c.l.b16 %v153
    %v642 = vunpack.c.h.b16 %v153
    %v643 = vunpack.c.l.b16 %v154
    %v644 = vunpack.c.h.b16 %v154
    %v645 = vunpack.c.l.b16 %v155
    %v646 = vunpack.c.h.b16 %v155
    %v647 = vunpack.c.l.b16 %v156
    %v648 = vunpack.c.h.b16 %v156
    %v649 = vunpack.c.l.b16 %v157
    %v650 = vunpack.c.h.b16 %v157
    %v651 = vunpack.c.l.b16 %v158
    %v652 = vunpack.c.h.b16 %v158
    %v653 = vunpack.c.l.b16 %v159
    %v654 = vunpack.c.h.b16 %v159
    %v655 = vunpack.c.l.b16 %v160
    %v656 = vunpack.c.h.b16 %v160
    %v657 = vunpack.c.l.b16 %v161
    %v658 = vunpack.c.h.b16 %v161
    %v659 = vunpack.c.l.b16 %v162
    %v660 = vunpack.c.h.b16 %v162
    %v661 = vunpack.c.l.b16 %v163
    %v662 = vunpack.c.h.b16 %v163
    %v663 = vunpack.c.l.b16 %v164
    %v664 = vunpack.c.h.b16 %v164
    %v665 = vunpack.c.l.b16 %v165
    %v666 = vunpack.c.h.b16 %v165
    %v667 = vunpack.c.l.b16 %v166
    %v668 = vunpack.c.h.b16 %v166
    %v669 = vunpack.c.l.b16 %v167
    %v670 = vunpack.c.h.b16 %v167
    %v671 = vunpack.c.l.b16 %v168
    %v672 = vunpack.c.h.b16 %v168
    %v673 = vunpack.c.l.b16 %v169
    %v674 = vunpack.c.h.b16 %v169
    %v675 = vunpack.c.l.b16 %v170
    %v676 = vunpack.c.h.b16 %v170
    %v677 = vunpack.c.l.b16 %v171
    %v678 = vunpack.c.h.b16 %v171
    %v679 = vunpack.c.l.b16 %v172
    %v680 = vunpack.c.h.b16 %v172
    %v681 = vunpack.c.l.b16 %v173
    %v682 = vunpack.c.h.b16 %v173
    %v683 = vunpack.c.l.b16 %v174
    %v684 = vunpack.c.h.b16 %v174
    %v685 = vunpack.c.l.b16 %v175
    %v686 = vunpack.c.h.b16 %v175
    %v687 = vunpack.c.l.b16 %v176
    %v688 = vunpack.c.h.b16 %v176
    %v689 = vunpack.c.l.b16 %v177
    %v690 = vunpack.c.h.b16 %v177
    %v691 = vunpack.c.l.b16 %v178
    %v692 = vunpack.c.h.b16 %v178
    %v693 = vunpack.c.l.b16 %v179
    %v694 = vunpack.c.h.b16 %v179
    %v695 = vunpack.c.l.b16 %v180
    %v696 = vunpack.c.h.b16 %v180
    %v697 = vunpack.c.l.b16 %v181
    %v698 = vunpack.c.h.b16 %v181
    %v699 = vunpack.c.l.b16 %v182
    %v700 = vunpack.c.h.b16 %v182
    %v701 = vunpack.c.l.b16 %v183
    %v702 = vunpack.c.h.b16 %v183
    %v703 = vunpack.c.l.b16 %v184
    %v704 = vunpack.c.h.b16 %v184
    %v705 = vunpack.c.l.b16 %v185
    %v706 = vunpack.c.h.b16 %v185
    %v707 = vunpack.c.l.b16 %v186
    %v708 = vunpack.c.h.b16 %v186
    %v709 = vunpack.c.l.b16 %v187
    %v710 = vunpack.c.h.b16 %v187
    %v711 = vunpack.c.l.b16 %v188
    %v712 = vunpack.c.h.b16 %v188
    %v713 = vunpack.c.l.b16 %v189
    %v714 = vunpack.c.h.b16 %v189
    %v715 = vunpack.c.l.b16 %v190
    %v716 = vunpack.c.h.b16 %v190
    %v717 = vunpack.c.l.b16 %v191
    %v718 = vunpack.c.h.b16 %v191
    %v719 = vunpack.c.l.b16 %v192
    %v720 = vunpack.c.h.b16 %v192
    %v721 = vunpack.c.l.b16 %v193
    %v722 = vunpack.c.h.b16 %v193
    %v723 = vunpack.c.l.b16 %v194
    %v724 = vunpack.c.h.b16 %v194
    %v725 = vunpack.c.l.b16 %v195
    %v726 = vunpack.c.h.b16 %v195
    %v727 = vunpack.c.l.b16 %v196
    %v728 = vunpack.c.h.b16 %v196
    %v729 = vunpack.c.l.b16 %v197
    %v730 = vunpack.c.h.b16 %v197
    %v731 = vunpack.c.l.b16 %v198
    %v732 = vunpack.c.h.b16 %v198
    %v733 = vunpack.c.l.b16 %v199
    %v734 = vunpack.c.h.b16 %v199
    %v735 = vunpack.c.l.b16 %v200
    %v736 = vunpack.c.h.b16 %v200
    %v737 = vunpack.c.l.b16 %v201
    %v738 = vunpack.c.h.b16 %v201
    %v739 = vunpack.c.l.b16 %v202
    %v740 = vunpack.c.h.b16 %v202
    %v741 = vunpack.c.l.b16 %v203
    %v742 = vunpack.c.h.b16 %v203
    %v743 = vunpack.c.l.b16 %v204
    %v744 = vunpack.c.h.b16 %v204
    %v745 = vunpack.c.l.b16 %v205
    %v746 = vunpack.c.h.b16 %v205
    %v747 = vunpack.c.l.b16 %v206
    %v748 = vunpack.c.h.b16 %v206
    %v749 = vunpack.c.l.b16 %v207
    %v750 = vunpack.c.h.b16 %v207
    %v751 = vunpack.c.l.b16 %v208
    %v752 = vunpack.c.h.b16 %v208
    %v753 = vunpack.c.l.b16 %v209
    %v754 = vunpack.c.h.b16 %v209
    %v755 = vunpack.c.l.b16 %v210
    %v756 = vunpack.c.h.b16 %v210
    %v757 = vunpack.c.l.b16 %v211
    %v758 = vunpack.c.h.b16 %v211
    %v759 = vunpack.c.l.b16 %v212
    %v760 = vunpack.c.h.b16 %v212
    %v761 = vunpack.c.l.b16 %v213
    %v762 = vunpack.c.h.b16 %v213
    %v763 = vunpack.c.l.b16 %v214
    %v764 = vunpack.c.h.b16 %v214
    %v765 = vunpack.c.l.b16 %v215
    %v766 = vunpack.c.h.b16 %v215
    %v767 = vunpack.c.l.b16 %v216
    %v768 = vunpack.c.h.b16 %v216
    %v769 = vunpack.c.l.b16 %v217
    %v770 = vunpack.c.h.b16 %v217
    %v771 = vunpack.c.l.b16 %v218
    %v772 = vunpack.c.h.b16 %v218
    %v773 = vunpack.c.l.b16 %v219
    %v774 = vunpack.c.h.b16 %v219
    %v775 = vunpack.c.l.b16 %v220
    %v776 = vunpack.c.h.b16 %v220
    %v777 = vunpack.c.l.b16 %v221
    %v778 = vunpack.c.h.b16 %v221
    %v779 = vunpack.c.l.b16 %v222
    %v780 = vunpack.c.h.b16 %v222
    %v781 = vunpack.c.l.b16 %v223
    %v782 = vunpack.c.h.b16 %v223
    %v783 = vunpack.c.l.b16 %v224
    %v784 = vunpack.c.h.b16 %v224
    %v785 = vunpack.c.l.b16 %v225
    %v786 = vunpack.c.h.b16 %v225
    %v787 = vunpack.c.l.b16 %v226
    %v788 = vunpack.c.h.b16 %v226
    %v789 = vunpack.c.l.b16 %v227
    %v790 = vunpack.c.h.b16 %v227
    %v791 = vunpack.c.l.b16 %v228
    %v792 = vunpack.c.h.b16 %v228
    %v793 = vunpack.c.l.b16 %v229
    %v794 = vunpack.c.h.b16 %v229
    %v795 = vunpack.c.l.b16 %v230
    %v796 = vunpack.c.h.b16 %v230
    %v797 = vunpack.c.l.b16 %v231
    %v798 = vunpack.c.h.b16 %v231
    %v799 = vunpack.c.l.b16 %v232
    %v800 = vunpack.c.h.b16 %v232
    %v801 = vunpack.c.l.b16 %v233
    %v802 = vunpack.c.h.b16 %v233
    %v803 = vunpack.c.l.b16 %v234
    %v804 = vunpack.c.h.b16 %v234
    %v805 = vunpack.c.l.b16 %v235
    %v806 = vunpack.c.h.b16 %v235
    %v807 = vunpack.c.l.b16 %v236
    %v808 = vunpack.c.h.b16 %v236
    %v809 = vunpack.c.l.b16 %v237
    %v810 = vunpack.c.h.b16 %v237
    %v811 = vunpack.c.l.b16 %v238
    %v812 = vunpack.c.h.b16 %v238
    %v813 = vunpack.c.l.b16 %v239
    %v814 = vunpack.c.h.b16 %v239
    %v815 = vunpack.c.l.b16 %v240
    %v816 = vunpack.c.h.b16 %v240
    %v817 = vunpack.c.l.b16 %v241
    %v818 = vunpack.c.h.b16 %v241
    %v819 = vunpack.c.l.b16 %v242
    %v820 = vunpack.c.h.b16 %v242
    %v821 = vunpack.c.l.b16 %v243
    %v822 = vunpack.c.h.b16 %v243
    %v823 = vunpack.c.l.b16 %v244
    %v824 = vunpack.c.h.b16 %v244
    %v825 = vunpack.c.l.b16 %v245
    %v826 = vunpack.c.h.b16 %v245
    %v827 = vunpack.c.l.b16 %v246
    %v828 = vunpack.c.h.b16 %v246
    %v829 = vunpack.c.l.b16 %v247
    %v830 = vunpack.c.h.b16 %v247
    %v831 = vunpack.c.l.b16 %v248
    %v832 = vunpack.c.h.b16 %v248
    %v833 = vunpack.c.l.b16 %v249
    %v834 = vunpack.c.h.b16 %v249
    %v835 = vunpack.c.l.b16 %v250
    %v836 = vunpack.c.h.b16 %v250
    %v837 = vunpack.c.l.b16 %v251
    %v838 = vunpack.c.h.b16 %v251
    %v839 = vunpack.c.l.b16 %v252
    %v840 = vunpack.c.h.b16 %v252
    %v841 = vunpack.c.l.b16 %v253
    %v842 = vunpack.c.h.b16 %v253
    %v843 = vunpack.c.l.b16 %v254
    %v844 = vunpack.c.h.b16 %v254
    %v845 = vunpack.c.l.b16 %v255
    %v846 = vunpack.c.h.b16 %v255
    %v847 = vunpack.c.l.b16 %v256
    %v848 = vunpack.c.h.b16 %v256
    %v849 = vunpack.c.l.b16 %v257
    %v850 = vunpack.c.h.b16 %v257
    %v851 = vunpack.c.l.b16 %v258
    %v852 = vunpack.c.h.b16 %v258
    %v853 = vunpack.c.l.b16 %v259
    %v854 = vunpack.c.h.b16 %v259
    %v855 = vunpack.c.l.b16 %v260
    %v856 = vunpack.c.h.b16 %v260
    %v857 = vunpack.c.l.b16 %v261
    %v858 = vunpack.c.h.b16 %v261
    %v859 = vunpack.c.l.b16 %v262
    %v860 = vunpack.c.h.b16 %v262
    %v861 = vunpack.c.l.b16 %v263
    %v862 = vunpack.c.h.b16 %v263
    %v863 = vunpack.c.l.b16 %v264
    %v864 = vunpack.c.h.b16 %v264
    %v865 = vunpack.c.l.b16 %v265
    %v866 = vunpack.c.h.b16 %v265
    %v867 = vunpack.c.l.b16 %v266
    %v868 = vunpack.c.h.b16 %v266
    %v869 = vunpack.c.l.b16 %v267
    %v870 = vunpack.c.h.b16 %v267
    %v871 = vunpack.c.l.b16 %v268
    %v872 = vunpack.c.h.b16 %v268
    %v873 = vunpack.c.l.b16 %v269
    %v874 = vunpack.c.h.b16 %v269
    %v875 = vunpack.c.l.b16 %v270
    %v876 = vunpack.c.h.b16 %v270
    %v877 = vpack.c.b16 %v497, %v493
    %v878 = vpack.c.b16 %v498, %v494
    %v879 = vpack.c.b16 %v499, %v495
    %v880 = vpack.c.b16 %v500, %v496
    %v881 = vpack.c.b16 %v505, %v501
    %v882 = vpack.c.b16 %v506, %v502
    %v883 = vpack.c.b16 %v507, %v503
    %v884 = vpack.c.b16 %v508, %v504
    %v885 = vpack.c.b16 %v513, %v509
    %v886 = vpack.c.b16 %v514, %v510
    %v887 = vpack.c.b16 %v515, %v511
    %v888 = vpack.c.b16 %v516, %v512
    %v889 = vpack.c.b16 %v521, %v517
    %v890 = vpack.c.b16 %v522, %v518
    %v891 = vpack.c.b16 %v523, %v519
    %v892 = vpack.c.b16 %v524, %v520
    %v893 = vpack.c.b16 %v529, %v525
    %v894 = vpack.c.b16 %v530, %v526
    %v895 = vpack.c.b16 %v531, %v527
    %v896 = vpack.c.b16 %v532, %v528
    %v897 = vpack.c.b16 %v537, %v533
    %v898 = vpack.c.b16 %v538, %v534
    %v899 = vpack.c.b16 %v539, %v535
    %v900 = vpack.c.b16 %v540, %v536
    %v901 = vpack.c.b16 %v545, %v541
    %v902 = vpack.c.b16 %v546, %v542
    %v903 = vpack.c.b16 %v547, %v543
    %v904 = vpack.c.b16 %v548, %v544
    %v905 = vpack.c.b16 %v553, %v549
    %v906 = vpack.c.b16 %v554, %v550
    %v907 = vpack.c.b16 %v555, %v551
    %v908 = vpack.c.b16 %v556, %v552
    %v909 = vpack.c.b16 %v561, %v557
    %v910 = vpack.c.b16 %v562, %v558
    %v911 = vpack.c.b16 %v563, %v559
    %v912 = vpack.c.b16 %v564, %v560
    %v913 = vpack.c.b16 %v569, %v565
    %v914 = vpack.c.b16 %v570, %v566
    %v915 = vpack.c.b16 %v571, %v567
    %v916 = vpack.c.b16 %v572, %v568
    %v917 = vpack.c.b16 %v577, %v573
    %v918 = vpack.c.b16 %v578, %v574
    %v919 = vpack.c.b16 %v579, %v575
    %v920 = vpack.c.b16 %v580, %v576
    %v921 = vpack.c.b16 %v585, %v581
    %v922 = vpack.c.b16 %v586, %v582
    %v923 = vpack.c.b16 %v587, %v583
    %v924 = vpack.c.b16 %v588, %v584
    %v925 = vpack.c.b16 %v593, %v589
    %v926 = vpack.c.b16 %v594, %v590
    %v927 = vpack.c.b16 %v595, %v591
    %v928 = vpack.c.b16 %v596, %v592
    %v929 = vpack.c.b16 %v601, %v597
    %v930 = vpack.c.b16 %v602, %v598
    %v931 = vpack.c.b16 %v603, %v599
    %v932 = vpack.c.b16 %v604, %v600
    %v933 = vpack.c.b16 %v609, %v605
    %v934 = vpack.c.b16 %v610, %v606
    %v935 = vpack.c.b16 %v611, %v607
    %v936 = vpack.c.b16 %v612, %v608
    %v937 = vpack.c.b16 %v617, %v613
    %v938 = vpack.c.b16 %v618, %v614
    %v939 = vpack.c.b16 %v619, %v615
    %v940 = vpack.c.b16 %v620, %v616
    %v941 = vpack.c.b16 %v625, %v621
    %v942 = vpack.c.b16 %v626, %v622
    %v943 = vpack.c.b16 %v627, %v623
    %v944 = vpack.c.b16 %v628, %v624
    %v945 = vpack.c.b16 %v633, %v629
    %v946 = vpack.c.b16 %v634, %v630
    %v947 = vpack.c.b16 %v635, %v631
    %v948 = vpack.c.b16 %v636, %v632
    %v949 = vpack.c.b16 %v641, %v637
    %v950 = vpack.c.b16 %v642, %v638
    %v951 = vpack.c.b16 %v643, %v639
    %v952 = vpack.c.b16 %v644, %v640
    %v953 = vpack.c.b16 %v649, %v645
    %v954 = vpack.c.b16 %v650, %v646
    %v955 = vpack.c.b16 %v651, %v647
    %v956 = vpack.c.b16 %v652, %v648
    %v957 = vpack.c.b16 %v657, %v653
    %v958 = vpack.c.b16 %v658, %v654
    %v959 = vpack.c.b16 %v659, %v655
    %v960 = vpack.c.b16 %v660, %v656
    %v961 = vpack.c.b16 %v665, %v661
    %v962 = vpack.c.b16 %v666, %v662
    %v963 = vpack.c.b16 %v667, %v663
    %v964 = vpack.c.b16 %v668, %v664
    %v965 = vpack.c.b16 %v673, %v669
    %v966 = vpack.c.b16 %v674, %v670
    %v967 = vpack.c.b16 %v675, %v671
    %v968 = vpack.c.b16 %v676, %v672
    %v969 = vpack.c.b16 %v681, %v677
    %v970 = vpack.c.b16 %v682, %v678
    %v971 = vpack.c.b16 %v683, %v679
    %v972 = vpack.c.b16 %v684, %v680
    %v973 = vpack.c.b16 %v689, %v685
    %v974 = vpack.c.b16 %v690, %v686
    %v975 = vpack.c.b16 %v691, %v687
    %v976 = vpack.c.b16 %v692, %v688
    %v977 = vpack.c.b16 %v697, %v693
    %v978 = vpack.c.b16 %v698, %v694
    %v979 = vpack.c.b16 %v699, %v695
    %v980 = vpack.c.b16 %v700, %v696
    %v981 = vpack.c.b16 %v705, %v701
    %v982 = vpack.c.b16 %v706, %v702
    %v983 = vpack.c.b16 %v707, %v703
    %v984 = vpack.c.b16 %v708, %v704
    %v985 = vpack.c.b16 %v713, %v709
    %v986 = vpack.c.b16 %v714, %v710
    %v987 = vpack.c.b16 %v715, %v711
    %v988 = vpack.c.b16 %v716, %v712
    %v989 = vpack.c.b16 %v721, %v717
    %v990 = vpack.c.b16 %v722, %v718
    %v991 = vpack.c.b16 %v723, %v719
    %v992 = vpack.c.b16 %v724, %v720
    %v993 = vpack.c.b16 %v729, %v725
    %v994 = vpack.c.b16 %v730, %v726
    %v995 = vpack.c.b16 %v731, %v727
    %v996 = vpack.c.b16 %v732, %v728
    %v997 = vpack.c.b16 %v737, %v733
    %v998 = vpack.c.b16 %v738, %v734
    %v999 = vpack.c.b16 %v739, %v735
    %v1000 = vpack.c.b16 %v740, %v736
    %v1001 = vpack.c.b16 %v745, %v741
    %v1002 = vpack.c.b16 %v746, %v742
    %v1003 = vpack.c.b16 %v747, %v743
    %v1004 = vpack.c.b16 %v748, %v744
    %v1005 = vpack.c.b16 %v753, %v749
    %v1006 = vpack.c.b16 %v754, %v750
    %v1007 = vpack.c.b16 %v755, %v751
    %v1008 = vpack.c.b16 %v756, %v752
    %v1009 = vpack.c.b16 %v761, %v757
    %v1010 = vpack.c.b16 %v762, %v758
    %v1011 = vpack.c.b16 %v763, %v759
    %v1012 = vpack.c.b16 %v764, %v760
    %v1013 = vpack.c.b16 %v769, %v765
    %v1014 = vpack.c.b16 %v770, %v766
    %v1015 = vpack.c.b16 %v771, %v767
    %v1016 = vpack.c.b16 %v772, %v768
    %v1017 = vpack.c.b16 %v777, %v773
    %v1018 = vpack.c.b16 %v778, %v774
    %v1019 = vpack.c.b16 %v779, %v775
    %v1020 = vpack.c.b16 %v780, %v776
    %v1021 = vpack.c.b16 %v785, %v781
    %v1022 = vpack.c.b16 %v786, %v782
    %v1023 = vpack.c.b16 %v787, %v783
    %v1024 = vpack.c.b16 %v788, %v784
    %v1025 = vpack.c.b16 %v793, %v789
    %v1026 = vpack.c.b16 %v794, %v790
    %v1027 = vpack.c.b16 %v795, %v791
    %v1028 = vpack.c.b16 %v796, %v792
    %v1029 = vpack.c.b16 %v801, %v797
    %v1030 = vpack.c.b16 %v802, %v798
    %v1031 = vpack.c.b16 %v803, %v799
    %v1032 = vpack.c.b16 %v804, %v800
    %v1033 = vpack.c.b16 %v809, %v805
    %v1034 = vpack.c.b16 %v810, %v806
    %v1035 = vpack.c.b16 %v811, %v807
    %v1036 = vpack.c.b16 %v812, %v808
    %v1037 = vpack.c.b16 %v817, %v813
    %v1038 = vpack.c.b16 %v818, %v814
    %v1039 = vpack.c.b16 %v819, %v815
    %v1040 = vpack.c.b16 %v820, %v816
    %v1041 = vpack.c.b16 %v825, %v821
    %v1042 = vpack.c.b16 %v826, %v822
    %v1043 = vpack.c.b16 %v827, %v823
    %v1044 = vpack.c.b16 %v828, %v824
    %v1045 = vpack.c.b16 %v833, %v829
    %v1046 = vpack.c.b16 %v834, %v830
    %v1047 = vpack.c.b16 %v835, %v831
    %v1048 = vpack.c.b16 %v836, %v832
    %v1049 = vpack.c.b16 %v841, %v837
    %v1050 = vpack.c.b16 %v842, %v838
    %v1051 = vpack.c.b16 %v843, %v839
    %v1052 = vpack.c.b16 %v844, %v840
    %v1053 = vpack.c.b16 %v849, %v845
    %v1054 = vpack.c.b16 %v850, %v846
    %v1055 = vpack.c.b16 %v851, %v847
    %v1056 = vpack.c.b16 %v852, %v848
    %v1057 = vpack.c.b16 %v857, %v853
    %v1058 = vpack.c.b16 %v858, %v854
    %v1059 = vpack.c.b16 %v859, %v855
    %v1060 = vpack.c.b16 %v860, %v856
    %v1061 = vpack.c.b16 %v865, %v861
    %v1062 = vpack.c.b16 %v866, %v862
    %v1063 = vpack.c.b16 %v867, %v863
    %v1064 = vpack.c.b16 %v868, %v864
    %v1065 = vpack.c.b16 %v873, %v869
    %v1066 = vpack.c.b16 %v874, %v870
    %v1067 = vpack.c.b16 %v875, %v871
    %v1068 = vpack.c.b16 %v876, %v872
    %1261 = vmatprep.subr.bf16.mxu0 %v878
    %1262 = vmatpush1.bf16.msra.mxu0 %v877
    %1263 = vmatprep.subr.bf16.mxu0 %v882
    %1264 = vmatpush1.bf16.msra.mxu0 %v881
    %1265 = vmatprep.subr.bf16.mxu0 %v886
    %1266 = vmatpush1.bf16.msra.mxu0 %v885
    %1267 = vmatprep.subr.bf16.mxu0 %v890
    %1268 = vmatpush1.bf16.msra.mxu0 %v889
    %1269 = vmatprep.subr.bf16.mxu0 %v894
    %1270 = vmatpush1.bf16.msra.mxu0 %v893
    %1271 = vmatprep.subr.bf16.mxu0 %v898
    %1272 = vmatpush1.bf16.msra.mxu0 %v897
    %1273 = vmatprep.subr.bf16.mxu0 %v902
    %1274 = vmatpush1.bf16.msra.mxu0 %v901
    %1275 = vmatprep.subr.bf16.mxu0 %v906
    %1276 = vmatpush1.bf16.msra.mxu0 %v905
    %1277 = vmatprep.subr.bf16.mxu0 %v910
    %1278 = vmatpush1.bf16.msra.mxu0 %v909
    %1279 = vmatprep.subr.bf16.mxu0 %v914
    %1280 = vmatpush1.bf16.msra.mxu0 %v913
    %1281 = vmatprep.subr.bf16.mxu0 %v918
    %1282 = vmatpush1.bf16.msra.mxu0 %v917
    %1283 = vmatprep.subr.bf16.mxu0 %v922
    %1284 = vmatpush1.bf16.msra.mxu0 %v921
    %1285 = vmatprep.subr.bf16.mxu0 %v926
    %1286 = vmatpush1.bf16.msra.mxu0 %v925
    %1287 = vmatprep.subr.bf16.mxu0 %v930
    %1288 = vmatpush1.bf16.msra.mxu0 %v929
    %1289 = vmatprep.subr.bf16.mxu0 %v934
    %1290 = vmatpush1.bf16.msra.mxu0 %v933
    %1291 = vmatprep.subr.bf16.mxu0 %v938
    %1292 = vmatpush1.bf16.msra.mxu0 %v937
    %1293 = vmatprep.mubr.bf16.mxu0 %v290
    %1294 = vmatmul.mubr.bf16.gmra.mrb[0].mxu0 %v289
    %v1295 = vpop.f32.mrb[0].mxu0
    %v1296 = vadd.f32 0.0, %v1295
    %v1297 = vpop.f32.mrb[0].mxu0
    %v1298 = vadd.f32 0.0, %v1297
    %v1299 = vpop.f32.mrb[0].mxu0
    %v1300 = vadd.f32 0.0, %v1299
    %v1301 = vpop.f32.mrb[0].mxu0
    %v1302 = vadd.f32 0.0, %v1301
    %1303 = vdwg.mxu0
    %1304 = vmatprep.subr.bf16.mxu0 %v942
    %1305 = vmatpush1.bf16.msra.mxu0 %v941
    %1306 = vmatprep.subr.bf16.mxu0 %v946
    %1307 = vmatpush1.bf16.msra.mxu0 %v945
    %1308 = vmatprep.subr.bf16.mxu0 %v950
    %1309 = vmatpush1.bf16.msra.mxu0 %v949
    %1310 = vmatprep.subr.bf16.mxu0 %v954
    %1311 = vmatpush1.bf16.msra.mxu0 %v953
    %1312 = vmatprep.subr.bf16.mxu0 %v958
    %1313 = vmatpush1.bf16.msra.mxu0 %v957
    %1314 = vmatprep.subr.bf16.mxu0 %v962
    %1315 = vmatpush1.bf16.msra.mxu0 %v961
    %1316 = vmatprep.subr.bf16.mxu0 %v966
    %1317 = vmatpush1.bf16.msra.mxu0 %v965
    %1318 = vmatprep.subr.bf16.mxu0 %v970
    %1319 = vmatpush1.bf16.msra.mxu0 %v969
    %1320 = vmatprep.subr.bf16.mxu0 %v974
    %1321 = vmatpush1.bf16.msra.mxu0 %v973
    %1322 = vmatprep.subr.bf16.mxu0 %v978
    %1323 = vmatpush1.bf16.msra.mxu0 %v977
    %1324 = vmatprep.subr.bf16.mxu0 %v982
    %1325 = vmatpush1.bf16.msra.mxu0 %v981
    %1326 = vmatprep.subr.bf16.mxu0 %v986
    %1327 = vmatpush1.bf16.msra.mxu0 %v985
    %1328 = vmatprep.subr.bf16.mxu0 %v990
    %1329 = vmatpush1.bf16.msra.mxu0 %v989
    %1330 = vmatprep.subr.bf16.mxu0 %v994
    %1331 = vmatpush1.bf16.msra.mxu0 %v993
    %1332 = vmatprep.subr.bf16.mxu0 %v998
    %1333 = vmatpush1.bf16.msra.mxu0 %v997
    %1334 = vmatprep.subr.bf16.mxu0 %v1002
    %1335 = vmatpush1.bf16.msra.mxu0 %v1001
    %1336 = vmatprep.mubr.bf16.mxu0 %v292
    %1337 = vmatmul.mubr.bf16.gmra.mrb[0].mxu0 %v291
    %v1338 = vpop.f32.mrb[0].mxu0
    %v1339 = vadd.f32 %v1296, %v1338
    %v1340 = vpop.f32.mrb[0].mxu0
    %v1341 = vadd.f32 %v1298, %v1340
    %v1342 = vpop.f32.mrb[0].mxu0
    %v1343 = vadd.f32 %v1300, %v1342
    %v1344 = vpop.f32.mrb[0].mxu0
    %v1345 = vadd.f32 %v1302, %v1344
    %1346 = vdwg.mxu0
    %1347 = vmatprep.subr.bf16.mxu0 %v1006
    %1348 = vmatpush1.bf16.msra.mxu0 %v1005
    %1349 = vmatprep.subr.bf16.mxu0 %v1010
    %1350 = vmatpush1.bf16.msra.mxu0 %v1009
    %1351 = vmatprep.subr.bf16.mxu0 %v1014
    %1352 = vmatpush1.bf16.msra.mxu0 %v1013
    %1353 = vmatprep.subr.bf16.mxu0 %v1018
    %1354 = vmatpush1.bf16.msra.mxu0 %v1017
    %1355 = vmatprep.subr.bf16.mxu0 %v1022
    %1356 = vmatpush1.bf16.msra.mxu0 %v1021
    %1357 = vmatprep.subr.bf16.mxu0 %v1026
    %1358 = vmatpush1.bf16.msra.mxu0 %v1025
    %1359 = vmatprep.subr.bf16.mxu0 %v1030
    %1360 = vmatpush1.bf16.msra.mxu0 %v1029
    %1361 = vmatprep.subr.bf16.mxu0 %v1034
    %1362 = vmatpush1.bf16.msra.mxu0 %v1033
    %1363 = vmatprep.subr.bf16.mxu0 %v1038
    %1364 = vmatpush1.bf16.msra.mxu0 %v1037
    %1365 = vmatprep.subr.bf16.mxu0 %v1042
    %1366 = vmatpush1.bf16.msra.mxu0 %v1041
    %1367 = vmatprep.subr.bf16.mxu0 %v1046
    %1368 = vmatpush1.bf16.msra.mxu0 %v1045
    %1369 = vmatprep.subr.bf16.mxu0 %v1050
    %1370 = vmatpush1.bf16.msra.mxu0 %v1049
    %1371 = vmatprep.subr.bf16.mxu0 %v1054
    %1372 = vmatpush1.bf16.msra.mxu0 %v1053
    %1373 = vmatprep.subr.bf16.mxu0 %v1058
    %1374 = vmatpush1.bf16.msra.mxu0 %v1057
    %1375 = vmatprep.subr.bf16.mxu0 %v1062
    %1376 = vmatpush1.bf16.msra.mxu0 %v1061
    %1377 = vmatprep.subr.bf16.mxu0 %v1066
    %1378 = vmatpush1.bf16.msra.mxu0 %v1065
    %1379 = vmatprep.mubr.bf16.mxu0 %v294
    %1380 = vmatmul.mubr.bf16.gmra.mrb[0].mxu0 %v293
    %v1381 = vpop.f32.mrb[0].mxu0
    %v1382 = vadd.f32 %v1339, %v1381
    %v1383 = vpop.f32.mrb[0].mxu0
    %v1384 = vadd.f32 %v1341, %v1383
    %v1385 = vpop.f32.mrb[0].mxu0
    %v1386 = vadd.f32 %v1343, %v1385
    %v1387 = vpop.f32.mrb[0].mxu0
    %v1388 = vadd.f32 %v1345, %v1387
    %1389 = vdwg.mxu0
    %1390 = vmatprep.subr.bf16.mxu0 %v880
    %1391 = vmatpush1.bf16.msra.mxu0 %v879
    %1392 = vmatprep.subr.bf16.mxu0 %v884
    %1393 = vmatpush1.bf16.msra.mxu0 %v883
    %1394 = vmatprep.subr.bf16.mxu0 %v888
    %1395 = vmatpush1.bf16.msra.mxu0 %v887
    %1396 = vmatprep.subr.bf16.mxu0 %v892
    %1397 = vmatpush1.bf16.msra.mxu0 %v891
    %1398 = vmatprep.subr.bf16.mxu0 %v896
    %1399 = vmatpush1.bf16.msra.mxu0 %v895
    %1400 = vmatprep.subr.bf16.mxu0 %v900
    %1401 = vmatpush1.bf16.msra.mxu0 %v899
    %1402 = vmatprep.subr.bf16.mxu0 %v904
    %1403 = vmatpush1.bf16.msra.mxu0 %v903
    %1404 = vmatprep.subr.bf16.mxu0 %v908
    %1405 = vmatpush1.bf16.msra.mxu0 %v907
    %1406 = vmatprep.subr.bf16.mxu0 %v912
    %1407 = vmatpush1.bf16.msra.mxu0 %v911
    %1408 = vmatprep.subr.bf16.mxu0 %v916
    %1409 = vmatpush1.bf16.msra.mxu0 %v915
    %1410 = vmatprep.subr.bf16.mxu0 %v920
    %1411 = vmatpush1.bf16.msra.mxu0 %v919
    %1412 = vmatprep.subr.bf16.mxu0 %v924
    %1413 = vmatpush1.bf16.msra.mxu0 %v923
    %1414 = vmatprep.subr.bf16.mxu0 %v928
    %1415 = vmatpush1.bf16.msra.mxu0 %v927
    %1416 = vmatprep.subr.bf16.mxu0 %v932
    %1417 = vmatpush1.bf16.msra.mxu0 %v931
    %1418 = vmatprep.subr.bf16.mxu0 %v936
    %1419 = vmatpush1.bf16.msra.mxu0 %v935
    %1420 = vmatprep.subr.bf16.mxu0 %v940
    %1421 = vmatpush1.bf16.msra.mxu0 %v939
    %1422 = vmatprep.mubr.bf16.mxu0 %v290
    %1423 = vmatmul.mubr.bf16.gmra.mrb[0].mxu0 %v289
    %v1424 = vpop.f32.mrb[0].mxu0
    %v1425 = vadd.f32 0.0, %v1424
    %v1426 = vpop.f32.mrb[0].mxu0
    %v1427 = vadd.f32 0.0, %v1426
    %v1428 = vpop.f32.mrb[0].mxu0
    %v1429 = vadd.f32 0.0, %v1428
    %v1430 = vpop.f32.mrb[0].mxu0
    %v1431 = vadd.f32 0.0, %v1430
    %1432 = vdwg.mxu0
    %1433 = vmatprep.subr.bf16.mxu0 %v944
    %1434 = vmatpush1.bf16.msra.mxu0 %v943
    %1435 = vmatprep.subr.bf16.mxu0 %v948
    %1436 = vmatpush1.bf16.msra.mxu0 %v947
    %1437 = vmatprep.subr.bf16.mxu0 %v952
    %1438 = vmatpush1.bf16.msra.mxu0 %v951
    %1439 = vmatprep.subr.bf16.mxu0 %v956
    %1440 = vmatpush1.bf16.msra.mxu0 %v955
    %1441 = vmatprep.subr.bf16.mxu0 %v960
    %1442 = vmatpush1.bf16.msra.mxu0 %v959
    %1443 = vmatprep.subr.bf16.mxu0 %v964
    %1444 = vmatpush1.bf16.msra.mxu0 %v963
    %1445 = vmatprep.subr.bf16.mxu0 %v968
    %1446 = vmatpush1.bf16.msra.mxu0 %v967
    %1447 = vmatprep.subr.bf16.mxu0 %v972
    %1448 = vmatpush1.bf16.msra.mxu0 %v971
    %1449 = vmatprep.subr.bf16.mxu0 %v976
    %1450 = vmatpush1.bf16.msra.mxu0 %v975
    %1451 = vmatprep.subr.bf16.mxu0 %v980
    %1452 = vmatpush1.bf16.msra.mxu0 %v979
    %1453 = vmatprep.subr.bf16.mxu0 %v984
    %1454 = vmatpush1.bf16.msra.mxu0 %v983
    %1455 = vmatprep.subr.bf16.mxu0 %v988
    %1456 = vmatpush1.bf16.msra.mxu0 %v987
    %1457 = vmatprep.subr.bf16.mxu0 %v992
    %1458 = vmatpush1.bf16.msra.mxu0 %v991
    %1459 = vmatprep.subr.bf16.mxu0 %v996
    %1460 = vmatpush1.bf16.msra.mxu0 %v995
    %1461 = vmatprep.subr.bf16.mxu0 %v1000
    %1462 = vmatpush1.bf16.msra.mxu0 %v999
    %1463 = vmatprep.subr.bf16.mxu0 %v1004
    %1464 = vmatpush1.bf16.msra.mxu0 %v1003
    %1465 = vmatprep.mubr.bf16.mxu0 %v292
    %1466 = vmatmul.mubr.bf16.gmra.mrb[0].mxu0 %v291
    %v1467 = vpop.f32.mrb[0].mxu0
    %v1468 = vadd.f32 %v1425, %v1467
    %v1469 = vpop.f32.mrb[0].mxu0
    %v1470 = vadd.f32 %v1427, %v1469
    %v1471 = vpop.f32.mrb[0].mxu0
    %v1472 = vadd.f32 %v1429, %v1471
    %v1473 = vpop.f32.mrb[0].mxu0
    %v1474 = vadd.f32 %v1431, %v1473
    %1475 = vdwg.mxu0
    %1476 = vmatprep.subr.bf16.mxu0 %v1008
    %1477 = vmatpush1.bf16.msra.mxu0 %v1007
    %1478 = vmatprep.subr.bf16.mxu0 %v1012
    %1479 = vmatpush1.bf16.msra.mxu0 %v1011
    %1480 = vmatprep.subr.bf16.mxu0 %v1016
    %1481 = vmatpush1.bf16.msra.mxu0 %v1015
    %1482 = vmatprep.subr.bf16.mxu0 %v1020
    %1483 = vmatpush1.bf16.msra.mxu0 %v1019
    %1484 = vmatprep.subr.bf16.mxu0 %v1024
    %1485 = vmatpush1.bf16.msra.mxu0 %v1023
    %1486 = vmatprep.subr.bf16.mxu0 %v1028
    %1487 = vmatpush1.bf16.msra.mxu0 %v1027
    %1488 = vmatprep.subr.bf16.mxu0 %v1032
    %1489 = vmatpush1.bf16.msra.mxu0 %v1031
    %1490 = vmatprep.subr.bf16.mxu0 %v1036
    %1491 = vmatpush1.bf16.msra.mxu0 %v1035
    %1492 = vmatprep.subr.bf16.mxu0 %v1040
    %1493 = vmatpush1.bf16.msra.mxu0 %v1039
    %1494 = vmatprep.subr.bf16.mxu0 %v1044
    %1495 = vmatpush1.bf16.msra.mxu0 %v1043
    %1496 = vmatprep.subr.bf16.mxu0 %v1048
    %1497 = vmatpush1.bf16.msra.mxu0 %v1047
    %1498 = vmatprep.subr.bf16.mxu0 %v1052
    %1499 = vmatpush1.bf16.msra.mxu0 %v1051
    %1500 = vmatprep.subr.bf16.mxu0 %v1056
    %1501 = vmatpush1.bf16.msra.mxu0 %v1055
    %1502 = vmatprep.subr.bf16.mxu0 %v1060
    %1503 = vmatpush1.bf16.msra.mxu0 %v1059
    %1504 = vmatprep.subr.bf16.mxu0 %v1064
    %1505 = vmatpush1.bf16.msra.mxu0 %v1063
    %1506 = vmatprep.subr.bf16.mxu0 %v1068
    %1507 = vmatpush1.bf16.msra.mxu0 %v1067
    %1508 = vmatprep.mubr.bf16.mxu0 %v294
    %1509 = vmatmul.mubr.bf16.gmra.mrb[0].mxu0 %v293
    %v1510 = vpop.f32.mrb[0].mxu0
    %v1511 = vadd.f32 %v1468, %v1510
    %v1512 = vpop.f32.mrb[0].mxu0
    %v1513 = vadd.f32 %v1470, %v1512
    %v1514 = vpop.f32.mrb[0].mxu0
    %v1515 = vadd.f32 %v1472, %v1514
    %v1516 = vpop.f32.mrb[0].mxu0
    %v1517 = vadd.f32 %v1474, %v1516
    %1518 = vdwg.mxu0
    %v1519 = vadd.f32 %v65, %v1382
    %v1520 = vadd.f32 %v66, %v1384
    %v1521 = vadd.f32 %v67, %v1511
    %v1522 = vadd.f32 %v68, %v1513
    %v1523 = vadd.f32 %v69, %v1386
    %v1524 = vadd.f32 %v70, %v1388
    %v1525 = vadd.f32 %v71, %v1515
    %v1526 = vadd.f32 %v72, %v1517
    %1527 = vst [vmem:[#allocation2] sm:$0xff] %v1519
    %1528 = vst [vmem:[#allocation2 + $0x8] sm:$0xff] %v1520
    %1529 = vst [vmem:[#allocation2 + $0x10] sm:$0xff] %v1521
    %1530 = vst [vmem:[#allocation2 + $0x18] sm:$0xff] %v1522
    %1531 = vst [vmem:[#allocation2 + $0x20] sm:$0xff] %v1523
    %1532 = vst [vmem:[#allocation2 + $0x28] sm:$0xff] %v1524
    %1533 = vst [vmem:[#allocation2 + $0x30] sm:$0xff] %v1525
    %1534 = vst [vmem:[#allocation2 + $0x38] sm:$0xff] %v1526
    // Predicated region
    $region30: #{tpu_custom_call.1} parent=1 // pred_check
      %p1535 = pneg %p53
    $region31: #{tpu_custom_call.1} parent=1 // pred_check_branch
      %1537 = sbr.rel (%p1535) target = $region33
    $region32: #{tpu_custom_call.1} parent=1 // pred_region
      %v1538 = vld [vmem:[#allocation2] sm:$0xff]
      %v1539 = vld [vmem:[#allocation2 + $0x8] sm:$0xff]
      %v1540 = vld [vmem:[#allocation2 + $0x10] sm:$0xff]
      %v1541 = vld [vmem:[#allocation2 + $0x18] sm:$0xff]
      %v1542 = vld [vmem:[#allocation2 + $0x20] sm:$0xff]
      %v1543 = vld [vmem:[#allocation2 + $0x28] sm:$0xff]
      %v1544 = vld [vmem:[#allocation2 + $0x30] sm:$0xff]
      %v1545 = vld [vmem:[#allocation2 + $0x38] sm:$0xff]
      %v1546 = vld [vmem:[#allocation7] ss:$8 sm:$0xf]
      %v1548 = vlaneseq
      %v1549 = vshrl.u32 %v1548, 7
      %v1550 = vsub.s32 0, %v1549
      %v1551 = vrot.slane %v1546, %v1550
      %v1552 = vlaneseq
      %v1553 = vshrl.u32 %v1552, 7
      %v1554 = vsub.s32 1, %v1553
      %v1555 = vrot.slane %v1546, %v1554
      %v1556 = vlaneseq
      %v1557 = vshrl.u32 %v1556, 7
      %v1558 = vsub.s32 2, %v1557
      %v1559 = vrot.slane %v1546, %v1558
      %v1560 = vlaneseq
      %v1561 = vshrl.u32 %v1560, 7
      %v1562 = vsub.s32 3, %v1561
      %v1563 = vrot.slane %v1546, %v1562
      %v1568 = vadd.f32 %v1538, %v1551
      %v1569 = vadd.f32 %v1539, %v1555
      %v1570 = vadd.f32 %v1540, %v1559
      %v1571 = vadd.f32 %v1541, %v1563
      %v1572 = vadd.f32 %v1542, %v1551
      %v1573 = vadd.f32 %v1543, %v1555
      %v1574 = vadd.f32 %v1544, %v1559
      %v1575 = vadd.f32 %v1545, %v1563
      %v1576 = vmax.f32 %v1568, 0.0
      %v1577 = vmax.f32 %v1569, 0.0
      %v1578 = vmax.f32 %v1570, 0.0
      %v1579 = vmax.f32 %v1571, 0.0
      %v1580 = vmax.f32 %v1572, 0.0
      %v1581 = vmax.f32 %v1573, 0.0
      %v1582 = vmax.f32 %v1574, 0.0
      %v1583 = vmax.f32 %v1575, 0.0
      %s1584 = scalar_lea.vmem [#allocation7], 1
      %v1585 = vld [vmem:[%s1584] ss:$8 sm:$0xf]
      %v1587 = vlaneseq
      %v1588 = vshrl.u32 %v1587, 7
      %v1589 = vsub.s32 0, %v1588
      %v1590 = vrot.slane %v1585, %v1589
      %v1591 = vlaneseq
      %v1592 = vshrl.u32 %v1591, 7
      %v1593 = vsub.s32 1, %v1592
      %v1594 = vrot.slane %v1585, %v1593
      %v1595 = vlaneseq
      %v1596 = vshrl.u32 %v1595, 7
      %v1597 = vsub.s32 2, %v1596
      %v1598 = vrot.slane %v1585, %v1597
      %v1599 = vlaneseq
      %v1600 = vshrl.u32 %v1599, 7
      %v1601 = vsub.s32 3, %v1600
      %v1602 = vrot.slane %v1585, %v1601
      %v1607 = vmul.f32 %v1576, %v1590
      %v1608 = vmul.f32 %v1577, %v1594
      %v1609 = vmul.f32 %v1578, %v1598
      %v1610 = vmul.f32 %v1579, %v1602
      %v1611 = vmul.f32 %v1580, %v1590
      %v1612 = vmul.f32 %v1581, %v1594
      %v1613 = vmul.f32 %v1582, %v1598
      %v1614 = vmul.f32 %v1583, %v1602
      %v1615 = vadd.f32 %v1607, %v1608
      %v1616 = vadd.f32 %v1615, %v1609
      %v1617 = vadd.f32 %v1616, %v1610
      %1618 = vadd.xlane.f32.xlu0 %v1617
      %v1619 = vpop.xlane.xlu0 %1618
      %v1620 = vadd.f32 %v1611, %v1612
      %v1621 = vadd.f32 %v1620, %v1613
      %v1622 = vadd.f32 %v1621, %v1614
      %1623 = vadd.xlane.f32.xlu0 %v1622
      %v1624 = vpop.xlane.xlu0 %1623
      %vm1625 = vcmask 7168
      %1626 = vst.msk [vmem:[%s3] sm:$0xff] %vm1625, %v1619
      %1627 = vst.msk [vmem:[%s3 + $0x8] sm:$0xff] %vm1625, %v1624
    $region33: #{tpu_custom_call.1} parent=1 // pred_fallthru
      _
    // Predicated region
    $region34: #{tpu_custom_call.1} parent=1 // pred_check
      _
    $region35: #{tpu_custom_call.1} parent=1 // pred_check_branch
      %1629 = sbr.rel (0) target = $region37
    $region36: #{tpu_custom_call.1} parent=1 // pred_region
      _
    $region37: #{tpu_custom_call.1} parent=1 // pred_fallthru
      _
    // Predicated region
    $region38: #{tpu_custom_call.1} parent=1 // pred_check
      _
    $region39: #{tpu_custom_call.1} parent=1 // pred_check_branch
      %1631 = sbr.rel (0) target = $region41
    $region40: #{tpu_custom_call.1} parent=1 // pred_region
      _
    $region41: #{tpu_custom_call.1} parent=1 // pred_fallthru
      _
    %1632 = vsyncpa [#allocation4], 1
    %1633 = vsyncpa [#allocation6], 1

</llo_original>
